<compile_context>
chip_gen: v6e
topology: v6e:2x2x1
jax: 0.10.0
libtpu: 0.0.40
codegen_flags: <defaults>
</compile_context>

<pallas_src>
import functools

import jax
import jax.numpy as jnp
from jax.experimental import pallas as pl
from jax.experimental.pallas import tpu as pltpu

_LANE = 128  # TPU lane width; batch tiles are kept lane-aligned.


def _round_up(n, m):
    return ((n + m - 1) // m) * m


def _mlp_kernel_t(x_ref, w1_ref, b1_ref, w2_ref, b2_ref, o_ref):
    """Feature-major MLP: every operand has batch on the lane (minor) axis.

    x_ref : [F, TB]    w1_ref: [H, F]    b1_ref: [H, 1]
    w2_ref: [O, H]     b2_ref: [O, 1]    o_ref : [O, TB]
    """
    x = x_ref[...]
    # h^T = W1 @ x^T : (H, F) @ (F, TB) -> (H, TB); f32 accumulation on the MXU.
    h = jnp.dot(w1_ref[...], x.astype(w1_ref.dtype),
                preferred_element_type=jnp.float32)
    # Bias add + relu in f32 on the VPU (biases are always stored f32).
    h = jnp.maximum(h + b1_ref[...], 0.0)
    # out^T = W2 @ h^T : (O, H) @ (H, TB) -> (O, TB); f32 accumulation.
    out = jnp.dot(w2_ref[...], h.astype(w2_ref.dtype),
                  preferred_element_type=jnp.float32)
    o_ref[...] = (out + b2_ref[...]).astype(o_ref.dtype)


def prepare_params(w1, b1, w2, b2, *, param_dtype=jnp.float32):
    """One-off layout prep from PyTorch Linear layouts.

    w1: [H, F], b1: [H], w2: [O, H], b2: [O].
    The feature-major kernel uses the weights in their native (output-major)
    orientation, so no transpose and no 128-lane padding is needed; only the
    biases become column vectors.  Weights may be stored bf16 (param_dtype) to
    halve their HBM/VMEM traffic on v6e/v7x; biases stay f32 so the VPU
    add/relu stays f32 (important on v5e, which has no bf16 VALU).
    """
    w1p = jnp.asarray(w1, dtype=param_dtype)
    b1p = jnp.asarray(b1, dtype=jnp.float32).reshape(-1, 1)
    w2p = jnp.asarray(w2, dtype=param_dtype)
    b2p = jnp.asarray(b2, dtype=jnp.float32).reshape(-1, 1)
    return w1p, b1p, w2p, b2p


def prepare_input(x):
    """Producer-side packing: [B, F] -> feature-major [F, B].

    With F = n_feature << 128, the batch-major layout wastes ~32x HBM bytes
    (each (8, F) chunk occupies a full (8,128) tile).  Ideally the producer
    emits the feature-major layout directly; this helper is the one-off
    fallback and is NOT part of the hot forward path.
    """
    return jnp.asarray(x).T


@functools.partial(jax.jit, static_argnames=("batch_tile", "out_batch_major"))
def net_forward(x_fm, w1p, b1p, w2p, b2p, *, batch_tile=4096,
                out_batch_major=True):
    """Hot path.  x_fm: feature-major activations [F, B] (see prepare_input).

    Returns [B, n_output] (the PyTorch module contract) when
    out_batch_major=True, or the batch-minor [n_output, B] slab (skipping even
    the tiny final transpose) when the consumer can take it directly.
    """
    F, B = x_fm.shape
    H = w1p.shape[0]
    O = w2p.shape[0]
    vmem = pltpu.MemorySpace.VMEM

    cost = pl.CostEstimate(
        flops=2 * B * (F * H + H * O),
        transcendentals=0,
        bytes_accessed=(
            _round_up(F, 8) * B * x_fm.dtype.itemsize      # x (8-sublane padded)
            + _round_up(O, 8) * B * 4                      # out (f32)
            + (w1p.size + w2p.size) * w1p.dtype.itemsize   # weights
            + (b1p.size + b2p.size) * 4),                  # biases (f32)
    )

    if B <= batch_tile:
        # Small / mid batch: single invocation, all operands VMEM-resident, no
        # per-step grid overhead (preferred on single-core v5e/v6e).  On v7x,
        # pass a smaller batch_tile for mid-size B to get >=2 even grid steps
        # across both TensorCores.
        out_t = pl.pallas_call(
            _mlp_kernel_t,
            out_shape=jax.ShapeDtypeStruct((O, B), jnp.float32),
            in_specs=[pl.BlockSpec(memory_space=vmem)] * 5,
            out_specs=pl.BlockSpec(memory_space=vmem),
            cost_estimate=cost,
        )(x_fm, w1p, b1p, w2p, b2p)
    else:
        # Large batch: tile the lane (batch) axis.  Force an even step count so
        # v7x's two TensorCores split the "parallel" axis evenly (no-op on
        # v5e/v6e), and keep tiles lane-aligned (multiples of 128).
        steps = pl.cdiv(B, batch_tile)
        steps = steps + (steps % 2)                      # even, >= 2
        tb = _round_up(pl.cdiv(B, steps), _LANE)
        # Per-step VMEM (worst case f32): 2*(8*tb*4) x + 2*(8*tb*4) out
        # + 32*tb*4 hidden temp + <1 KiB resident weights ~= 256*tb bytes
        # (~2 MiB at tb=8192): well inside the 32 MiB default scoped limit,
        # even on v7x's 64 MiB VMEM, so no vmem_limit_bytes override is needed.
        out_t = pl.pallas_call(
            _mlp_kernel_t,
            out_shape=jax.ShapeDtypeStruct((O, B), jnp.float32),
            grid_spec=pltpu.PrefetchScalarGridSpec(
                num_scalar_prefetch=0,
                grid=(pl.cdiv(B, tb),),
                in_specs=[
                    pl.BlockSpec((F, tb), lambda i: (0, i)),   # x tile (lane-dense)
                    pl.BlockSpec((H, F), lambda i: (0, 0)),    # resident W1
                    pl.BlockSpec((H, 1), lambda i: (0, 0)),    # resident b1
                    pl.BlockSpec((O, H), lambda i: (0, 0)),    # resident W2
                    pl.BlockSpec((O, 1), lambda i: (0, 0)),    # resident b2
                ],
                out_specs=pl.BlockSpec((O, tb), lambda i: (0, i)),
            ),
            compiler_params=pltpu.CompilerParams(
                dimension_semantics=("parallel",)),
            cost_estimate=cost,
        )(x_fm, w1p, b1p, w2p, b2p)

    if out_batch_major:
        # Module contract [B, n_output].  The slab is only n_output (=2) rows,
        # so this is a tiny layout op; consumers that accept batch-minor output
        # should pass out_batch_major=False and skip it.
        return out_t.T
    return out_t


def net_forward_batch_major(x, w1p, b1p, w2p, b2p, **kwargs):
    """Drop-in equivalent of the PyTorch forward: x is [B, F].

    Packs x feature-major first (one extra pass over x); prefer emitting x
    feature-major at the producer and calling net_forward directly.
    """
    return net_forward(prepare_input(x), w1p, b1p, w2p, b2p, **kwargs)


if __name__ == "__main__":
    # Net(n_feature=4, n_hidden=32, n_output=2)
    F, H, O = 4, 32, 2

    key = jax.random.PRNGKey(0)
    kx, kw1, kb1, kw2, kb2, kxl = jax.random.split(key, 6)

    # Deterministic parameter init (PyTorch Linear shapes: weight [out, in]).
    bound1 = 1.0 / jnp.sqrt(F)
    w1 = jax.random.uniform(kw1, (H, F), minval=-bound1, maxval=bound1,
                            dtype=jnp.float32)
    b1 = jax.random.uniform(kb1, (H,), minval=-bound1, maxval=bound1,
                            dtype=jnp.float32)
    bound2 = 1.0 / jnp.sqrt(H)
    w2 = jax.random.uniform(kw2, (O, H), minval=-bound2, maxval=bound2,
                            dtype=jnp.float32)
    b2 = jax.random.uniform(kb2, (O,), minval=-bound2, maxval=bound2,
                            dtype=jnp.float32)

    def torch_ref(xx):
        return jnp.maximum(xx @ w1.T + b1, 0.0) @ w2.T + b2

    # --- f32 params: exact module numerics --------------------------------
    w1p, b1p, w2p, b2p = prepare_params(w1, b1, w2, b2)

    # 1) Small batch, grid-less path.
    B = 8
    x = jax.random.normal(kx, (B, F), dtype=jnp.float32)
    x_fm = prepare_input(x)                       # producer-side packing
    out = jax.block_until_ready(net_forward(x_fm, w1p, b1p, w2p, b2p))
    assert out.shape == (B, O)
    assert jnp.allclose(out, torch_ref(x), atol=1e-5, rtol=1e-5)

    # 2) Larger batch, batch-tiled grid path (even step count, lane-dense tiles,
    #    partial last tile exercised).
    Bl = 5000
    xl = jax.random.normal(kxl, (Bl, F), dtype=jnp.float32)
    xl_fm = prepare_input(xl)
    out_l = jax.block_until_ready(
        net_forward(xl_fm, w1p, b1p, w2p, b2p, batch_tile=2048))
    assert out_l.shape == (Bl, O)
    assert jnp.allclose(out_l, torch_ref(xl), atol=1e-5, rtol=1e-5)

    # 3) bf16 weights (v6e/v7x traffic halving); MXU accumulation stays f32,
    #    so only a modest tolerance loosening is needed.
    w1b, b1b, w2b, b2b = prepare_params(w1, b1, w2, b2,
                                        param_dtype=jnp.bfloat16)
    out_bf = jax.block_until_ready(
        net_forward(xl_fm, w1b, b1b, w2b, b2b, batch_tile=2048))
    assert out_bf.shape == (Bl, O)
    assert jnp.allclose(out_bf, torch_ref(xl), atol=5e-2, rtol=5e-2)

    print("KERNEL_OK")
</pallas_src>

<mosaic_0001>
module attributes {stable_mosaic.version = 11 : i64} {
  func.func @_mlp_kernel_t(%arg0: memref<4x8xf32, #tpu.memory_space<vmem>>, %arg1: memref<32x4xf32, #tpu.memory_space<vmem>>, %arg2: memref<32x1xf32, #tpu.memory_space<vmem>>, %arg3: memref<2x32xf32, #tpu.memory_space<vmem>>, %arg4: memref<2x1xf32, #tpu.memory_space<vmem>>, %arg5: memref<2x8xf32, #tpu.memory_space<vmem>>) attributes {dimension_semantics = [], scalar_prefetch = 0 : i64, scratch_operands = 0 : i64, tpu.core_type = #tpu.core_type<tc>} {
    %c0 = arith.constant 0 : index
    %c0_0 = arith.constant 0 : index
    %0 = vector.load %arg0[%c0, %c0_0] : memref<4x8xf32, #tpu.memory_space<vmem>>, vector<4x8xf32>
    %c0_1 = arith.constant 0 : index
    %c0_2 = arith.constant 0 : index
    %1 = vector.load %arg1[%c0_1, %c0_2] : memref<32x4xf32, #tpu.memory_space<vmem>>, vector<32x4xf32>
    %cst = arith.constant dense<0.000000e+00> : vector<32x8xf32>
    %2 = tpu.matmul %1, %0, %cst {dimension_numbers = #tpu.dot_dimension_numbers<[1], [0], [0], [1], [0, 0, 1, 1], [], []>} : vector<32x4xf32>, vector<4x8xf32>, vector<32x8xf32> -> vector<32x8xf32>
    %c0_3 = arith.constant 0 : index
    %c0_4 = arith.constant 0 : index
    %3 = vector.load %arg2[%c0_3, %c0_4] : memref<32x1xf32, #tpu.memory_space<vmem>>, vector<32x1xf32>
    %4 = vector.broadcast %3 : vector<32x1xf32> to vector<32x8xf32>
    %5 = arith.addf %2, %4 : vector<32x8xf32>
    %cst_5 = arith.constant 0.000000e+00 : f32
    %6 = vector.broadcast %cst_5 : f32 to vector<32x8xf32>
    %7 = arith.maximumf %5, %6 : vector<32x8xf32>
    %c0_6 = arith.constant 0 : index
    %c0_7 = arith.constant 0 : index
    %8 = vector.load %arg3[%c0_6, %c0_7] : memref<2x32xf32, #tpu.memory_space<vmem>>, vector<2x32xf32>
    %cst_8 = arith.constant dense<0.000000e+00> : vector<2x8xf32>
    %9 = tpu.matmul %8, %7, %cst_8 {dimension_numbers = #tpu.dot_dimension_numbers<[1], [0], [0], [1], [0, 0, 1, 1], [], []>} : vector<2x32xf32>, vector<32x8xf32>, vector<2x8xf32> -> vector<2x8xf32>
    %c0_9 = arith.constant 0 : index
    %c0_10 = arith.constant 0 : index
    %10 = vector.load %arg4[%c0_9, %c0_10] : memref<2x1xf32, #tpu.memory_space<vmem>>, vector<2x1xf32>
    %11 = vector.broadcast %10 : vector<2x1xf32> to vector<2x8xf32>
    %12 = arith.addf %9, %11 : vector<2x8xf32>
    %c0_11 = arith.constant 0 : index
    %c0_12 = arith.constant 0 : index
    %13 = vector.load %arg5[%c0_11, %c0_12] : memref<2x8xf32, #tpu.memory_space<vmem>>, vector<2x8xf32>
    tpu.vector_store %arg5[%c0_11, %c0_12], %12 {strides = array<i32>} : memref<2x8xf32, #tpu.memory_space<vmem>>, vector<2x8xf32>,
    return
  }
}

</mosaic_0001>

<llo_original>
// kernel: net_forward.1
$region0: #{net_forward.1}
  #allocation0 [shape = 'u32[]', space=smem, size = 0x4, offset = 0x4, fixed_abs, tag = 'smem constant byte address 0x4 - core index']
  #allocation1 [shape = 'u32[144,128]{1,0:T(1,128)}', space=vmem, size = 0x12000, scoped, tag = 'internal scratch']
  %s0 = inlined_call_operand.vmem [shape: f32[4,8], index: 0, kind: input, shape index: {}]
  %s1 = inlined_call_operand.vmem [shape: f32[32,4], index: 1, kind: input, shape index: {}]
  %s2 = inlined_call_operand.vmem [shape: f32[32,1], index: 2, kind: input, shape index: {}]
  %s3 = inlined_call_operand.vmem [shape: f32[2,32], index: 3, kind: input, shape index: {}]
  %s4 = inlined_call_operand.vmem [shape: f32[2,1], index: 4, kind: input, shape index: {}]
  %s5 = inlined_call_operand.hbm [shape: f32[2,8], index: 5, kind: output, shape index: {}]
  %s6 = sld [smem:[#allocation0]]
  $region30: #{net_forward.1} parent=0
    _
  %s8 = ssub.s32 1, %s6
  %s9 = scalar_select 0, %s8, %s6
  $region1: #{net_forward.1} parent=0
    #allocation2 [shape = 'u8[1024]{0}', space=vmem, size = 0x400, scoped, tag = 'output window, operand 0, single buffered']
    #allocation3 [shape = 's32[1]{0}', space=sflag, size = 0x4, scoped, tag = 'scoped memory for net_forward.1']
    %10 = vsyncpa [#allocation3], 0
    // Predicated region
    $region2: #{net_forward.1} parent=1 // pred_check
      _
    $region3: #{net_forward.1} parent=1 // pred_check_branch
      %12 = sbr.rel (0) target = $region5
    $region4: #{net_forward.1} parent=1 // pred_region
      _
    $region5: #{net_forward.1} parent=1 // pred_fallthru
      _
    // Predicated region
    $region6: #{net_forward.1} parent=1 // pred_check
      _
    $region7: #{net_forward.1} parent=1 // pred_check_branch
      %14 = sbr.rel (0) target = $region9
    $region8: #{net_forward.1} parent=1 // pred_region
      _
    $region9: #{net_forward.1} parent=1 // pred_fallthru
      _
    // Predicated region
    $region10: #{net_forward.1} parent=1 // pred_check
      _
    $region11: #{net_forward.1} parent=1 // pred_check_branch
      %16 = sbr.rel (0) target = $region13
    $region12: #{net_forward.1} parent=1 // pred_region
      _
    $region13: #{net_forward.1} parent=1 // pred_fallthru
      _
    // Predicated region
    $region14: #{net_forward.1} parent=1 // pred_check
      _
    $region15: #{net_forward.1} parent=1 // pred_check_branch
      %18 = sbr.rel (0) target = $region17
    $region16: #{net_forward.1} parent=1 // pred_region
      _
    $region17: #{net_forward.1} parent=1 // pred_fallthru
      _
    // Predicated region
    $region18: #{net_forward.1} parent=1 // pred_check
      _
    $region19: #{net_forward.1} parent=1 // pred_check_branch
      %20 = sbr.rel (0) target = $region21
    $region20: #{net_forward.1} parent=1 // pred_region
      _
    $region21: #{net_forward.1} parent=1 // pred_fallthru
      _
    %v21 = vld [vmem:[%s0] sm:$0xf]
    %v22 = vld [vmem:[%s1] sm:$0xff]
    %v23 = vld [vmem:[%s1 + $0x8] sm:$0xff]
    %v24 = vld [vmem:[%s1 + $0x10] sm:$0xff]
    %v25 = vld [vmem:[%s1 + $0x18] sm:$0xff]
    %v26 = vld [vmem:[%s2] sm:$0xff]
    %v27 = vld [vmem:[%s2 + $0x8] sm:$0xff]
    %v28 = vld [vmem:[%s2 + $0x10] sm:$0xff]
    %v29 = vld [vmem:[%s2 + $0x18] sm:$0xff]
    %31 = vset.pattern.permute.xlu0 0
    %32 = vperm.xlu0 %31, %v26
    %v33 = vpop.permute.xlu0 %32
    %36 = vset.pattern.permute.xlu0 0
    %37 = vperm.xlu0 %36, %v27
    %v38 = vpop.permute.xlu0 %37
    %41 = vset.pattern.permute.xlu0 0
    %42 = vperm.xlu0 %41, %v28
    %v43 = vpop.permute.xlu0 %42
    %46 = vset.pattern.permute.xlu0 0
    %47 = vperm.xlu0 %46, %v29
    %v48 = vpop.permute.xlu0 %47
    %vm50 = vcmask 31744
    %v52 = vsel %vm50, %v22, 0
    %v55 = vsel %vm50, %v23, 0
    %v58 = vsel %vm50, %v24, 0
    %v61 = vsel %vm50, %v25, 0
    %vm63 = vcmask 1043456
    %v65 = vsel %vm63, %v21, 0
    %67 = vmatprep.subr.mxu0 0.0
    %68 = vmatpush1.msra.mxu0 0.0
    %69 = vmatprep.subr.mxu0 0.0
    %70 = vmatpush1.msra.mxu0 0.0
    %71 = vmatprep.subr.mxu0 0.0
    %72 = vmatpush1.msra.mxu0 0.0
    %73 = vmatprep.subr.mxu0 0.0
    %74 = vmatpush1.msra.mxu0 0.0
    %75 = vmatprep.subr.mxu0 0.0
    %76 = vmatpush1.msra.mxu0 0.0
    %77 = vmatprep.subr.mxu0 0.0
    %78 = vmatpush1.msra.mxu0 0.0
    %79 = vmatprep.subr.mxu0 0.0
    %80 = vmatpush1.msra.mxu0 0.0
    %81 = vmatprep.subr.mxu0 0.0
    %82 = vmatpush1.msra.mxu0 0.0
    %83 = vmatprep.subr.mxu0 0.0
    %84 = vmatpush1.msra.mxu0 0.0
    %85 = vmatprep.subr.mxu0 0.0
    %86 = vmatpush1.msra.mxu0 0.0
    %87 = vmatprep.subr.mxu0 0.0
    %88 = vmatpush1.msra.mxu0 0.0
    %89 = vmatprep.subr.mxu0 0.0
    %90 = vmatpush1.msra.mxu0 0.0
    %91 = vmatprep.subr.mxu0 0.0
    %92 = vmatpush1.msra.mxu0 0.0
    %93 = vmatprep.subr.mxu0 0.0
    %94 = vmatpush1.msra.mxu0 0.0
    %95 = vmatprep.subr.mxu0 0.0
    %96 = vmatpush1.msra.mxu0 0.0
    %97 = vmatprep.subr.mxu0 0.0
    %98 = vmatpush1.msra.mxu0 %v65
    %99 = vmatprep.subr.mxu0 0.0
    %100 = vmatpush2.msra.mxu0 0.0
    %101 = vmatprep.subr.mxu0 0.0
    %102 = vmatpush2.msra.mxu0 0.0
    %103 = vmatprep.subr.mxu0 0.0
    %104 = vmatpush2.msra.mxu0 0.0
    %105 = vmatprep.subr.mxu0 0.0
    %106 = vmatpush2.msra.mxu0 0.0
    %107 = vmatprep.subr.mxu0 0.0
    %108 = vmatpush2.msra.mxu0 0.0
    %109 = vmatprep.subr.mxu0 0.0
    %110 = vmatpush2.msra.mxu0 0.0
    %111 = vmatprep.subr.mxu0 0.0
    %112 = vmatpush2.msra.mxu0 0.0
    %113 = vmatprep.subr.mxu0 0.0
    %114 = vmatpush2.msra.mxu0 0.0
    %115 = vmatprep.subr.mxu0 0.0
    %116 = vmatpush2.msra.mxu0 0.0
    %117 = vmatprep.subr.mxu0 0.0
    %118 = vmatpush2.msra.mxu0 0.0
    %119 = vmatprep.subr.mxu0 0.0
    %120 = vmatpush2.msra.mxu0 0.0
    %121 = vmatprep.subr.mxu0 0.0
    %122 = vmatpush2.msra.mxu0 0.0
    %123 = vmatprep.subr.mxu0 0.0
    %124 = vmatpush2.msra.mxu0 0.0
    %125 = vmatprep.subr.mxu0 0.0
    %126 = vmatpush2.msra.mxu0 0.0
    %127 = vmatprep.subr.mxu0 0.0
    %128 = vmatpush2.msra.mxu0 0.0
    %129 = vmatprep.subr.mxu0 0.0
    %130 = vmatpush2.msra.mxu0 0.0
    %131 = vmatprep.mubr.f32.mxu0 0.0
    %132 = vmatmul.mubr.f32.gmra.mxu0 %v52
    %v133 = vpop.f32.mrf.mxu0
    %v134 = vadd.f32 %v33, %v133
    %v135 = vpop.f32.mrf.mxu0
    %136 = vmatprep.mubr.f32.mxu0 0.0
    %137 = vmatmul.mubr.f32.gmra.mxu0 %v55
    %v138 = vpop.f32.mrf.mxu0
    %v139 = vadd.f32 %v38, %v138
    %v140 = vpop.f32.mrf.mxu0
    %141 = vmatprep.mubr.f32.mxu0 0.0
    %142 = vmatmul.mubr.f32.gmra.mxu0 %v58
    %v143 = vpop.f32.mrf.mxu0
    %v144 = vadd.f32 %v43, %v143
    %v145 = vpop.f32.mrf.mxu0
    %146 = vmatprep.mubr.f32.mxu0 0.0
    %147 = vmatmul.mubr.f32.gmra.mxu0 %v61
    %v148 = vpop.f32.mrf.mxu0
    %v149 = vadd.f32 %v48, %v148
    %v150 = vpop.f32.mrf.mxu0
    %151 = vdwg.mxu0
    %v152 = vmax.f32 %v134, 0.0
    %v153 = vmax.f32 %v139, 0.0
    %v154 = vmax.f32 %v144, 0.0
    %v155 = vmax.f32 %v149, 0.0
    %v156 = vld [vmem:[%s3] sm:$0x3]
    %v157 = vld [vmem:[%s4] sm:$0x3]
    %159 = vset.pattern.permute.xlu0 0
    %160 = vperm.xlu0 %159, %v157
    %v161 = vpop.permute.xlu0 %160
    %vm163 = vcmask 261120
    %v165 = vsel %vm163, %v156, 0
    %167 = vmatprep.subr.mxu0 0.0
    %168 = vmatpush1.msra.mxu0 0.0
    %169 = vmatprep.subr.mxu0 0.0
    %170 = vmatpush1.msra.mxu0 0.0
    %171 = vmatprep.subr.mxu0 0.0
    %172 = vmatpush1.msra.mxu0 0.0
    %173 = vmatprep.subr.mxu0 0.0
    %174 = vmatpush1.msra.mxu0 0.0
    %175 = vmatprep.subr.mxu0 0.0
    %176 = vmatpush1.msra.mxu0 0.0
    %177 = vmatprep.subr.mxu0 0.0
    %178 = vmatpush1.msra.mxu0 0.0
    %179 = vmatprep.subr.mxu0 0.0
    %180 = vmatpush1.msra.mxu0 0.0
    %181 = vmatprep.subr.mxu0 0.0
    %182 = vmatpush1.msra.mxu0 0.0
    %183 = vmatprep.subr.mxu0 0.0
    %184 = vmatpush1.msra.mxu0 0.0
    %185 = vmatprep.subr.mxu0 0.0
    %186 = vmatpush1.msra.mxu0 0.0
    %187 = vmatprep.subr.mxu0 0.0
    %188 = vmatpush1.msra.mxu0 0.0
    %189 = vmatprep.subr.mxu0 0.0
    %190 = vmatpush1.msra.mxu0 0.0
    %191 = vmatprep.subr.mxu0 0.0
    %192 = vmatpush1.msra.mxu0 %v155
    %193 = vmatprep.subr.mxu0 0.0
    %194 = vmatpush1.msra.mxu0 %v154
    %195 = vmatprep.subr.mxu0 0.0
    %196 = vmatpush1.msra.mxu0 %v153
    %197 = vmatprep.subr.mxu0 0.0
    %198 = vmatpush1.msra.mxu0 %v152
    %199 = vmatprep.subr.mxu0 0.0
    %200 = vmatpush2.msra.mxu0 0.0
    %201 = vmatprep.subr.mxu0 0.0
    %202 = vmatpush2.msra.mxu0 0.0
    %203 = vmatprep.subr.mxu0 0.0
    %204 = vmatpush2.msra.mxu0 0.0
    %205 = vmatprep.subr.mxu0 0.0
    %206 = vmatpush2.msra.mxu0 0.0
    %207 = vmatprep.subr.mxu0 0.0
    %208 = vmatpush2.msra.mxu0 0.0
    %209 = vmatprep.subr.mxu0 0.0
    %210 = vmatpush2.msra.mxu0 0.0
    %211 = vmatprep.subr.mxu0 0.0
    %212 = vmatpush2.msra.mxu0 0.0
    %213 = vmatprep.subr.mxu0 0.0
    %214 = vmatpush2.msra.mxu0 0.0
    %215 = vmatprep.subr.mxu0 0.0
    %216 = vmatpush2.msra.mxu0 0.0
    %217 = vmatprep.subr.mxu0 0.0
    %218 = vmatpush2.msra.mxu0 0.0
    %219 = vmatprep.subr.mxu0 0.0
    %220 = vmatpush2.msra.mxu0 0.0
    %221 = vmatprep.subr.mxu0 0.0
    %222 = vmatpush2.msra.mxu0 0.0
    %223 = vmatprep.subr.mxu0 0.0
    %224 = vmatpush2.msra.mxu0 0.0
    %225 = vmatprep.subr.mxu0 0.0
    %226 = vmatpush2.msra.mxu0 0.0
    %227 = vmatprep.subr.mxu0 0.0
    %228 = vmatpush2.msra.mxu0 0.0
    %229 = vmatprep.subr.mxu0 0.0
    %230 = vmatpush2.msra.mxu0 0.0
    %231 = vmatprep.mubr.f32.mxu0 0.0
    %232 = vmatmul.mubr.f32.gmra.mxu0 %v165
    %v233 = vpop.f32.mrf.mxu0
    %v234 = vadd.f32 %v161, %v233
    %v235 = vpop.f32.mrf.mxu0
    %236 = vdwg.mxu0
    %vm237 = vcmask 58368
    %238 = vst.msk [vmem:[#allocation2] sm:$0x3] %vm237, %v234
    // Predicated region
    $region22: #{net_forward.1} parent=1 // pred_check
      _
    $region23: #{net_forward.1} parent=1 // pred_check_branch
      %240 = sbr.rel (0) target = $region25
    $region24: #{net_forward.1} parent=1 // pred_region
      %s242 = ssub.s32 32, 32
      %243 = vsyncadd [#allocation3], %s242
      %s245 = sshll.u32 [#allocation2], 4
      %s246 = int_to_ptr.vmem [resolvable:$true] %s245
      %248 = dma.vmem_to_hbm [thread:$0]  %s246, 32, %s5, [#allocation3]
    $region25: #{net_forward.1} parent=1 // pred_fallthru
      _
    // Predicated region
    $region26: #{net_forward.1} parent=1 // pred_check
      _
    $region27: #{net_forward.1} parent=1 // pred_check_branch
      %250 = sbr.rel (0) target = $region29
    $region28: #{net_forward.1} parent=1 // pred_region
      %251 = dma.done [#allocation3], 32
    $region29: #{net_forward.1} parent=1 // pred_fallthru
      _
    %252 = vsyncpa [#allocation3], 1

</llo_original>
